<compile_context>
chip_gen: v7x
topology: tpu7x:2x2x1
jax: 0.10.0
libtpu: 0.0.40
codegen_flags: <defaults>
</compile_context>

<pallas_src>
import jax
import jax.numpy as jnp
from jax import lax
from jax.experimental import pallas as pl
from jax.experimental.pallas import tpu as pltpu


def _geglu_kernel(x_ref, wx_ref, wg_ref, bx_ref, bg_ref, o_ref, acc_v, acc_g):
    k = pl.program_id(2)

    @pl.when(k == 0)
    def _init():
        acc_v[...] = jnp.zeros_like(acc_v)
        acc_g[...] = jnp.zeros_like(acc_g)

    x = x_ref[...]
    # value path and gate path partial products, f32 accumulation on the MXU
    acc_v[...] += jnp.dot(x, wx_ref[...], preferred_element_type=jnp.float32)
    acc_g[...] += jnp.dot(x, wg_ref[...], preferred_element_type=jnp.float32)

    @pl.when(k == pl.num_programs(2) - 1)
    def _epilogue():
        val = acc_v[...] + bx_ref[...].astype(jnp.float32)
        gate = acc_g[...] + bg_ref[...].astype(jnp.float32)
        # exact GELU (matches torch.nn.functional.gelu default, erf-based)
        inv_sqrt2 = jnp.float32(0.7071067811865476)
        gelu_gate = 0.5 * gate * (1.0 + lax.erf(gate * inv_sqrt2))
        o_ref[...] = (val * gelu_gate).astype(o_ref.dtype)


def _round_up(x, m):
    return ((x + m - 1) // m) * m


def geglu_pallas(x2d, w, b, dim_out, *, tm=256, tn=256, tk=256,
                 weight_dtype=None):
    """x2d: (M, dim_in); w: (2*dim_out, dim_in); b: (2*dim_out,).

    Default tiles are 256 (full MXU rows on v6e/v7x, 2x the v5e MXU edge);
    on v5e 128-granular tiles also work since everything is a 128 multiple.
    """
    M, dim_in = x2d.shape
    out_dtype = x2d.dtype

    # Clamp tiles for small problems while keeping TPU tiling minima
    # (sublane multiple of 8, lane multiple of 128).
    tm_eff = min(tm, _round_up(M, 8))
    tn_eff = min(tn, _round_up(dim_out, 128))
    tk_eff = min(tk, _round_up(dim_in, 128))

    m_pad = _round_up(M, tm_eff)
    n_pad = _round_up(dim_out, tn_eff)
    k_pad = _round_up(dim_in, tk_eff)

    # Pad activations (zero padding is neutral for the dot products).
    x_p = x2d
    if (m_pad, k_pad) != (M, dim_in):
        x_p = jnp.pad(x2d, ((0, m_pad - M), (0, k_pad - dim_in)))

    # Split / transpose / pad the nn.Linear weight and bias (wrapper glue;
    # cache these outside the call in a real model).
    wx_t = jnp.pad(jnp.transpose(w[:dim_out, :]),
                   ((0, k_pad - dim_in), (0, n_pad - dim_out)))
    wg_t = jnp.pad(jnp.transpose(w[dim_out:, :]),
                   ((0, k_pad - dim_in), (0, n_pad - dim_out)))
    bx = jnp.pad(b[:dim_out], (0, n_pad - dim_out)).reshape(1, n_pad)
    bg = jnp.pad(b[dim_out:], (0, n_pad - dim_out)).reshape(1, n_pad)

    if weight_dtype is not None:
        # bf16 operands halve HBM/VMEM traffic and hit native MXU rate;
        # accumulation stays f32 (results differ from f32 at ~1e-2 rel).
        x_p = x_p.astype(weight_dtype)
        wx_t = wx_t.astype(weight_dtype)
        wg_t = wg_t.astype(weight_dtype)

    grid = (m_pad // tm_eff, n_pad // tn_eff, k_pad // tk_eff)

    # Advisory cost estimate (two matmuls + one erf per output element).
    cost = pl.CostEstimate(
        flops=int(4 * m_pad * n_pad * k_pad),
        transcendentals=int(m_pad * n_pad),
        bytes_accessed=int(x_p.size * x_p.dtype.itemsize
                           + 2 * wx_t.size * wx_t.dtype.itemsize
                           + m_pad * n_pad * jnp.dtype(out_dtype).itemsize),
    )

    out = pl.pallas_call(
        _geglu_kernel,
        out_shape=jax.ShapeDtypeStruct((m_pad, n_pad), out_dtype),
        grid_spec=pltpu.PrefetchScalarGridSpec(
            num_scalar_prefetch=0,
            grid=grid,
            in_specs=[
                pl.BlockSpec((tm_eff, tk_eff), lambda i, j, k: (i, k)),  # x
                pl.BlockSpec((tk_eff, tn_eff), lambda i, j, k: (k, j)),  # Wx^T
                pl.BlockSpec((tk_eff, tn_eff), lambda i, j, k: (k, j)),  # Wg^T
                pl.BlockSpec((1, tn_eff), lambda i, j, k: (0, j)),       # bx
                pl.BlockSpec((1, tn_eff), lambda i, j, k: (0, j)),       # bg
            ],
            out_specs=pl.BlockSpec((tm_eff, tn_eff), lambda i, j, k: (i, j)),
            scratch_shapes=[pltpu.VMEM((tm_eff, tn_eff), jnp.float32),
                            pltpu.VMEM((tm_eff, tn_eff), jnp.float32)],
        ),
        compiler_params=pltpu.CompilerParams(
            dimension_semantics=("parallel", "parallel", "arbitrary")),
        cost_estimate=cost,
    )(x_p, wx_t, wg_t, bx, bg)

    if (m_pad, n_pad) != (M, dim_out):
        out = out[:M, :dim_out]
    return out


def geglu(x, w, b, dim_out, **kw):
    """x: (..., dim_in) -> (..., dim_out), matching the PyTorch GEGLU module."""
    dim_in = x.shape[-1]
    lead = x.shape[:-1]
    x2d = x.reshape(-1, dim_in)
    out2d = geglu_pallas(x2d, w, b, dim_out, **kw)
    return out2d.reshape(*lead, dim_out)


if __name__ == "__main__":
    # small shapes consistent with the module's forward on a (B, N, C) tensor
    B, N, dim_in, dim_out = 2, 8, 32, 32

    key = jax.random.PRNGKey(0)
    kx, kw, kb = jax.random.split(key, 3)

    x = jax.random.normal(kx, (B, N, dim_in), dtype=jnp.float32)
    # deterministic synthetic parameters (nn.Linear(dim_in, dim_out*2) shapes)
    w = jax.random.normal(kw, (dim_out * 2, dim_in), dtype=jnp.float32) * 0.05
    b = jax.random.normal(kb, (dim_out * 2,), dtype=jnp.float32) * 0.05

    out = geglu(x, w, b, dim_out)
    out = jax.block_until_ready(out)

    # silent correctness check against a pure-JAX reference
    proj = jnp.einsum("bnc,oc->bno", x, w) + b
    val_ref, gate_ref = proj[..., :dim_out], proj[..., dim_out:]
    ref = val_ref * jax.nn.gelu(gate_ref, approximate=False)
    assert out.shape == (B, N, dim_out)
    assert jnp.allclose(out, ref, atol=1e-5, rtol=1e-5)

    print("KERNEL_OK")
</pallas_src>

<mosaic_0001>
module attributes {stable_mosaic.version = 11 : i64} {
  func.func @_geglu_kernel(%arg0: i32, %arg1: i32, %arg2: i32, %arg3: memref<16x128xf32, #tpu.memory_space<vmem>>, %arg4: memref<128x128xf32, #tpu.memory_space<vmem>>, %arg5: memref<128x128xf32, #tpu.memory_space<vmem>>, %arg6: memref<1x128xf32, #tpu.memory_space<vmem>>, %arg7: memref<1x128xf32, #tpu.memory_space<vmem>>, %arg8: memref<16x128xf32, #tpu.memory_space<vmem>>, %arg9: memref<16x128xf32, #tpu.memory_space<vmem>>, %arg10: memref<16x128xf32, #tpu.memory_space<vmem>>) attributes {dimension_semantics = [#tpu.dimension_semantics<parallel>, #tpu.dimension_semantics<parallel>, #tpu.dimension_semantics<arbitrary>], iteration_bounds = array<i64: 1, 1, 1>, scalar_prefetch = 0 : i64, scratch_operands = 2 : i64, tpu.core_type = #tpu.core_type<tc>, window_params = [{transform_indices = @transform_0, window_bounds = array<i64: 16, 128>}, {transform_indices = @transform_1, window_bounds = array<i64: 128, 128>}, {transform_indices = @transform_2, window_bounds = array<i64: 128, 128>}, {transform_indices = @transform_3, window_bounds = array<i64: 1, 128>}, {transform_indices = @transform_4, window_bounds = array<i64: 1, 128>}, {transform_indices = @transform_5, window_bounds = array<i64: 16, 128>}]} {
    %c0_i32 = arith.constant 0 : i32
    %0 = arith.cmpi eq, %arg2, %c0_i32 : i32
    %1 = arith.extui %0 : i1 to i32
    %c0_i32_0 = arith.constant 0 : i32
    %2 = arith.cmpi ne, %1, %c0_i32_0 : i32
    scf.if %2 {
      %cst_17 = arith.constant 0.000000e+00 : f32
      %17 = vector.broadcast %cst_17 : f32 to vector<16x128xf32>
      %c0_18 = arith.constant 0 : index
      %c0_19 = arith.constant 0 : index
      %18 = vector.load %arg9[%c0_18, %c0_19] : memref<16x128xf32, #tpu.memory_space<vmem>>, vector<16x128xf32>
      tpu.vector_store %arg9[%c0_18, %c0_19], %17 {strides = array<i32>} : memref<16x128xf32, #tpu.memory_space<vmem>>, vector<16x128xf32>,
      %cst_20 = arith.constant 0.000000e+00 : f32
      %19 = vector.broadcast %cst_20 : f32 to vector<16x128xf32>
      %c0_21 = arith.constant 0 : index
      %c0_22 = arith.constant 0 : index
      %20 = vector.load %arg10[%c0_21, %c0_22] : memref<16x128xf32, #tpu.memory_space<vmem>>, vector<16x128xf32>
      tpu.vector_store %arg10[%c0_21, %c0_22], %19 {strides = array<i32>} : memref<16x128xf32, #tpu.memory_space<vmem>>, vector<16x128xf32>,
    } else {
    }
    %c0 = arith.constant 0 : index
    %c0_1 = arith.constant 0 : index
    %3 = vector.load %arg3[%c0, %c0_1] : memref<16x128xf32, #tpu.memory_space<vmem>>, vector<16x128xf32>
    %c0_2 = arith.constant 0 : index
    %c0_3 = arith.constant 0 : index
    %4 = vector.load %arg9[%c0_2, %c0_3] : memref<16x128xf32, #tpu.memory_space<vmem>>, vector<16x128xf32>
    %c0_4 = arith.constant 0 : index
    %c0_5 = arith.constant 0 : index
    %5 = vector.load %arg4[%c0_4, %c0_5] : memref<128x128xf32, #tpu.memory_space<vmem>>, vector<128x128xf32>
    %cst = arith.constant dense<0.000000e+00> : vector<16x128xf32>
    %6 = tpu.matmul %3, %5, %cst {dimension_numbers = #tpu.dot_dimension_numbers<[1], [0], [0], [1], [0, 0, 1, 1], [], []>} : vector<16x128xf32>, vector<128x128xf32>, vector<16x128xf32> -> vector<16x128xf32>
    %7 = arith.addf %4, %6 : vector<16x128xf32>
    %c0_6 = arith.constant 0 : index
    %c0_7 = arith.constant 0 : index
    %8 = vector.load %arg9[%c0_6, %c0_7] : memref<16x128xf32, #tpu.memory_space<vmem>>, vector<16x128xf32>
    tpu.vector_store %arg9[%c0_6, %c0_7], %7 {strides = array<i32>} : memref<16x128xf32, #tpu.memory_space<vmem>>, vector<16x128xf32>,
    %c0_8 = arith.constant 0 : index
    %c0_9 = arith.constant 0 : index
    %9 = vector.load %arg10[%c0_8, %c0_9] : memref<16x128xf32, #tpu.memory_space<vmem>>, vector<16x128xf32>
    %c0_10 = arith.constant 0 : index
    %c0_11 = arith.constant 0 : index
    %10 = vector.load %arg5[%c0_10, %c0_11] : memref<128x128xf32, #tpu.memory_space<vmem>>, vector<128x128xf32>
    %cst_12 = arith.constant dense<0.000000e+00> : vector<16x128xf32>
    %11 = tpu.matmul %3, %10, %cst_12 {dimension_numbers = #tpu.dot_dimension_numbers<[1], [0], [0], [1], [0, 0, 1, 1], [], []>} : vector<16x128xf32>, vector<128x128xf32>, vector<16x128xf32> -> vector<16x128xf32>
    %12 = arith.addf %9, %11 : vector<16x128xf32>
    %c0_13 = arith.constant 0 : index
    %c0_14 = arith.constant 0 : index
    %13 = vector.load %arg10[%c0_13, %c0_14] : memref<16x128xf32, #tpu.memory_space<vmem>>, vector<16x128xf32>
    tpu.vector_store %arg10[%c0_13, %c0_14], %12 {strides = array<i32>} : memref<16x128xf32, #tpu.memory_space<vmem>>, vector<16x128xf32>,
    %c0_i32_15 = arith.constant 0 : i32
    %14 = arith.cmpi eq, %arg2, %c0_i32_15 : i32
    %15 = arith.extui %14 : i1 to i32
    %c0_i32_16 = arith.constant 0 : i32
    %16 = arith.cmpi ne, %15, %c0_i32_16 : i32
    scf.if %16 {
      %c0_17 = arith.constant 0 : index
      %c0_18 = arith.constant 0 : index
      %17 = vector.load %arg9[%c0_17, %c0_18] : memref<16x128xf32, #tpu.memory_space<vmem>>, vector<16x128xf32>
      %c0_19 = arith.constant 0 : index
      %c0_20 = arith.constant 0 : index
      %18 = vector.load %arg6[%c0_19, %c0_20] : memref<1x128xf32, #tpu.memory_space<vmem>>, vector<1x128xf32>
      %19 = vector.broadcast %18 : vector<1x128xf32> to vector<16x128xf32>
      %20 = arith.addf %17, %19 : vector<16x128xf32>
      %c0_21 = arith.constant 0 : index
      %c0_22 = arith.constant 0 : index
      %21 = vector.load %arg10[%c0_21, %c0_22] : memref<16x128xf32, #tpu.memory_space<vmem>>, vector<16x128xf32>
      %c0_23 = arith.constant 0 : index
      %c0_24 = arith.constant 0 : index
      %22 = vector.load %arg7[%c0_23, %c0_24] : memref<1x128xf32, #tpu.memory_space<vmem>>, vector<1x128xf32>
      %23 = vector.broadcast %22 : vector<1x128xf32> to vector<16x128xf32>
      %24 = arith.addf %21, %23 : vector<16x128xf32>
      %cst_25 = arith.constant 5.000000e-01 : f32
      %25 = vector.broadcast %cst_25 : f32 to vector<16x128xf32>
      %26 = arith.mulf %25, %24 : vector<16x128xf32>
      %cst_26 = arith.constant 0.707106769 : f32
      %27 = vector.broadcast %cst_26 : f32 to vector<16x128xf32>
      %28 = arith.mulf %24, %27 : vector<16x128xf32>
      %29 = math.erf %28 : vector<16x128xf32>
      %cst_27 = arith.constant 1.000000e+00 : f32
      %30 = vector.broadcast %cst_27 : f32 to vector<16x128xf32>
      %31 = arith.addf %30, %29 : vector<16x128xf32>
      %32 = arith.mulf %26, %31 : vector<16x128xf32>
      %33 = arith.mulf %20, %32 : vector<16x128xf32>
      %c0_28 = arith.constant 0 : index
      %c0_29 = arith.constant 0 : index
      %34 = vector.load %arg8[%c0_28, %c0_29] : memref<16x128xf32, #tpu.memory_space<vmem>>, vector<16x128xf32>
      tpu.vector_store %arg8[%c0_28, %c0_29], %33 {strides = array<i32>} : memref<16x128xf32, #tpu.memory_space<vmem>>, vector<16x128xf32>,
    } else {
    }
    return
  }
  func.func @transform_0(%arg0: i32, %arg1: i32, %arg2: i32) -> (i32, i32) {
    %c0_i32 = arith.constant 0 : i32
    return %arg0, %arg2 : i32, i32
  }
  func.func @transform_1(%arg0: i32, %arg1: i32, %arg2: i32) -> (i32, i32) {
    %c0_i32 = arith.constant 0 : i32
    return %arg2, %arg1 : i32, i32
  }
  func.func @transform_2(%arg0: i32, %arg1: i32, %arg2: i32) -> (i32, i32) {
    %c0_i32 = arith.constant 0 : i32
    return %arg2, %arg1 : i32, i32
  }
  func.func @transform_3(%arg0: i32, %arg1: i32, %arg2: i32) -> (i32, i32) {
    %c0_i32 = arith.constant 0 : i32
    %c0_i32_0 = arith.constant 0 : i32
    return %c0_i32, %arg1 : i32, i32
  }
  func.func @transform_4(%arg0: i32, %arg1: i32, %arg2: i32) -> (i32, i32) {
    %c0_i32 = arith.constant 0 : i32
    %c0_i32_0 = arith.constant 0 : i32
    return %c0_i32, %arg1 : i32, i32
  }
  func.func @transform_5(%arg0: i32, %arg1: i32, %arg2: i32) -> (i32, i32) {
    %c0_i32 = arith.constant 0 : i32
    return %arg0, %arg1 : i32, i32
  }
}

</mosaic_0001>

<llo_original>
// kernel: tpu_custom_call.1
$region0: #{tpu_custom_call.1}
  #allocation0 [shape = 'u32[]', space=smem, size = 0x4, offset = 0x4, fixed_abs, tag = 'smem constant byte address 0x4 - core index']
  #allocation1 [shape = 'u32[144,128]{1,0:T(1,128)}', space=vmem, size = 0x12000, scoped, tag = 'internal scratch']
  #allocation2 [shape = 'f32[16,128]{1,0:T(8,128)}', space=vmem, size = 0x2000, scoped, tag = 'scratch operand']
  #allocation3 [shape = 'f32[16,128]{1,0:T(8,128)}', space=vmem, size = 0x2000, scoped, tag = 'scratch operand']
  %s0 = inlined_call_operand.hbm [shape: f32[16,128], index: 0, kind: input, shape index: {}]
  %s1 = inlined_call_operand.hbm [shape: f32[128,128], index: 1, kind: input, shape index: {}]
  %s2 = inlined_call_operand.hbm [shape: f32[128,128], index: 2, kind: input, shape index: {}]
  %s3 = inlined_call_operand.vmem [shape: f32[1,128], index: 3, kind: input, shape index: {}]
  %s4 = inlined_call_operand.vmem [shape: f32[1,128], index: 4, kind: input, shape index: {}]
  %s5 = inlined_call_operand.hbm [shape: f32[16,128], index: 5, kind: output, shape index: {}]
  %s6 = sld [smem:[#allocation0]]
  $region50: #{tpu_custom_call.1} parent=0
    _
  %s8 = ssub.s32 1, %s6
  %s9 = scalar_select 0, %s8, %s6
  $region1: #{tpu_custom_call.1} parent=0
    #allocation4 [shape = 'u8[8192]{0}', space=vmem, size = 0x2000, scoped, tag = 'input window, operand 0, single buffered']
    #allocation5 [shape = 's32[1]{0}', space=sflag, size = 0x4, scoped, tag = 'scoped memory for tpu_custom_call.1']
    #allocation6 [shape = 's32[1]{0}', space=sflag, size = 0x4, scoped, tag = 'scoped memory for tpu_custom_call.1']
    #allocation7 [shape = 'u8[65536]{0}', space=vmem, size = 0x10000, scoped, tag = 'input window, operand 1, single buffered']
    #allocation8 [shape = 's32[1]{0}', space=sflag, size = 0x4, scoped, tag = 'scoped memory for tpu_custom_call.1']
    #allocation9 [shape = 'u8[65536]{0}', space=vmem, size = 0x10000, scoped, tag = 'input window, operand 2, single buffered']
    #allocation10 [shape = 'u8[8192]{0}', space=vmem, size = 0x2000, scoped, tag = 'output window, operand 0, single buffered']
    %10 = vsyncpa [#allocation5], 0
    %11 = vsyncpa [#allocation8], 0
    %12 = vsyncpa [#allocation6], 0
    // Predicated region
    $region2: #{tpu_custom_call.1} parent=1 // pred_check
      _
    $region3: #{tpu_custom_call.1} parent=1 // pred_check_branch
      %14 = sbr.rel (0) target = $region5
    $region4: #{tpu_custom_call.1} parent=1 // pred_region
      %s16 = ssub.s32 256, 256
      %17 = vsyncadd [#allocation5], %s16
      %s18 = sshll.u32 [#allocation4], 4
      %s19 = int_to_ptr.vmem [resolvable:$true] %s18
      %24 = dma.hbm_to_vmem [thread:$0]  %s0, 256, %s19, [#allocation5], 128, 128, 8
    $region5: #{tpu_custom_call.1} parent=1 // pred_fallthru
      _
    // Predicated region
    $region6: #{tpu_custom_call.1} parent=1 // pred_check
      _
    $region7: #{tpu_custom_call.1} parent=1 // pred_check_branch
      %26 = sbr.rel (0) target = $region9
    $region8: #{tpu_custom_call.1} parent=1 // pred_region
      %s28 = ssub.s32 2048, 2048
      %29 = vsyncadd [#allocation8], %s28
      %s30 = sshll.u32 [#allocation7], 4
      %s31 = int_to_ptr.vmem [resolvable:$true] %s30
      %36 = dma.hbm_to_vmem [thread:$0]  %s1, 2048, %s31, [#allocation8], 128, 128, 8
    $region9: #{tpu_custom_call.1} parent=1 // pred_fallthru
      _
    // Predicated region
    $region10: #{tpu_custom_call.1} parent=1 // pred_check
      _
    $region11: #{tpu_custom_call.1} parent=1 // pred_check_branch
      %38 = sbr.rel (0) target = $region13
    $region12: #{tpu_custom_call.1} parent=1 // pred_region
      %s40 = ssub.s32 2048, 2048
      %41 = vsyncadd [#allocation8], %s40
      %s42 = sshll.u32 [#allocation9], 4
      %s43 = int_to_ptr.vmem [resolvable:$true] %s42
      %48 = dma.hbm_to_vmem [thread:$0]  %s2, 2048, %s43, [#allocation8], 128, 128, 8
    $region13: #{tpu_custom_call.1} parent=1 // pred_fallthru
      _
    // Predicated region
    $region14: #{tpu_custom_call.1} parent=1 // pred_check
      _
    $region15: #{tpu_custom_call.1} parent=1 // pred_check_branch
      %50 = sbr.rel (0) target = $region17
    $region16: #{tpu_custom_call.1} parent=1 // pred_region
      _
    $region17: #{tpu_custom_call.1} parent=1 // pred_fallthru
      _
    // Predicated region
    $region18: #{tpu_custom_call.1} parent=1 // pred_check
      _
    $region19: #{tpu_custom_call.1} parent=1 // pred_check_branch
      %52 = sbr.rel (0) target = $region21
    $region20: #{tpu_custom_call.1} parent=1 // pred_region
      _
    $region21: #{tpu_custom_call.1} parent=1 // pred_fallthru
      _
    // Predicated region
    $region22: #{tpu_custom_call.1} parent=1 // pred_check
      _
    $region23: #{tpu_custom_call.1} parent=1 // pred_check_branch
      %54 = sbr.rel (0) target = $region25
    $region24: #{tpu_custom_call.1} parent=1 // pred_region
      %55 = dma.done [#allocation5], 256
    $region25: #{tpu_custom_call.1} parent=1 // pred_fallthru
      _
    // Predicated region
    $region26: #{tpu_custom_call.1} parent=1 // pred_check
      _
    $region27: #{tpu_custom_call.1} parent=1 // pred_check_branch
      %57 = sbr.rel (0) target = $region29
    $region28: #{tpu_custom_call.1} parent=1 // pred_region
      %58 = dma.done [#allocation8], 2048
    $region29: #{tpu_custom_call.1} parent=1 // pred_fallthru
      _
    // Predicated region
    $region30: #{tpu_custom_call.1} parent=1 // pred_check
      _
    $region31: #{tpu_custom_call.1} parent=1 // pred_check_branch
      %60 = sbr.rel (0) target = $region33
    $region32: #{tpu_custom_call.1} parent=1 // pred_region
      %61 = dma.done [#allocation8], 2048
    $region33: #{tpu_custom_call.1} parent=1 // pred_fallthru
      _
    %p62 = scmp.eq.s32.totalorder 0, 0
    // Predicated region
    $region34: #{tpu_custom_call.1} parent=1 // pred_check
      %p63 = pneg %p62
    $region35: #{tpu_custom_call.1} parent=1 // pred_check_branch
      %65 = sbr.rel (%p63) target = $region37
    $region36: #{tpu_custom_call.1} parent=1 // pred_region
      %66 = vst [vmem:[#allocation2] sm:$0xff] 0.0
      %67 = vst [vmem:[#allocation2 + $0x8] sm:$0xff] 0.0
      %68 = vst [vmem:[#allocation3] sm:$0xff] 0.0
      %69 = vst [vmem:[#allocation3 + $0x8] sm:$0xff] 0.0
    $region37: #{tpu_custom_call.1} parent=1 // pred_fallthru
      _
    %v70 = vld [vmem:[#allocation4] sm:$0xff]
    %v71 = vld [vmem:[#allocation4 + $0x8] sm:$0xff]
    %v72 = vld [vmem:[#allocation2] sm:$0xff]
    %v73 = vld [vmem:[#allocation2 + $0x8] sm:$0xff]
    %v74 = vld [vmem:[#allocation7] sm:$0xff]
    %v75 = vld [vmem:[#allocation7 + $0x8] sm:$0xff]
    %v76 = vld [vmem:[#allocation7 + $0x10] sm:$0xff]
    %v77 = vld [vmem:[#allocation7 + $0x18] sm:$0xff]
    %v78 = vld [vmem:[#allocation7 + $0x20] sm:$0xff]
    %v79 = vld [vmem:[#allocation7 + $0x28] sm:$0xff]
    %v80 = vld [vmem:[#allocation7 + $0x30] sm:$0xff]
    %v81 = vld [vmem:[#allocation7 + $0x38] sm:$0xff]
    %v82 = vld [vmem:[#allocation7 + $0x40] sm:$0xff]
    %v83 = vld [vmem:[#allocation7 + $0x48] sm:$0xff]
    %v84 = vld [vmem:[#allocation7 + $0x50] sm:$0xff]
    %v85 = vld [vmem:[#allocation7 + $0x58] sm:$0xff]
    %v86 = vld [vmem:[#allocation7 + $0x60] sm:$0xff]
    %v87 = vld [vmem:[#allocation7 + $0x68] sm:$0xff]
    %v88 = vld [vmem:[#allocation7 + $0x70] sm:$0xff]
    %v89 = vld [vmem:[#allocation7 + $0x78] sm:$0xff]
    %90 = vmatprep.subr.mxu0 0.0
    %91 = vmatpush1.msra.mxu0 %v74
    %92 = vmatprep.subr.mxu0 0.0
    %93 = vmatpush1.msra.mxu0 %v75
    %94 = vmatprep.subr.mxu0 0.0
    %95 = vmatpush1.msra.mxu0 %v76
    %96 = vmatprep.subr.mxu0 0.0
    %97 = vmatpush1.msra.mxu0 %v77
    %98 = vmatprep.subr.mxu0 0.0
    %99 = vmatpush1.msra.mxu0 %v78
    %100 = vmatprep.subr.mxu0 0.0
    %101 = vmatpush1.msra.mxu0 %v79
    %102 = vmatprep.subr.mxu0 0.0
    %103 = vmatpush1.msra.mxu0 %v80
    %104 = vmatprep.subr.mxu0 0.0
    %105 = vmatpush1.msra.mxu0 %v81
    %106 = vmatprep.subr.mxu0 0.0
    %107 = vmatpush1.msra.mxu0 %v82
    %108 = vmatprep.subr.mxu0 0.0
    %109 = vmatpush1.msra.mxu0 %v83
    %110 = vmatprep.subr.mxu0 0.0
    %111 = vmatpush1.msra.mxu0 %v84
    %112 = vmatprep.subr.mxu0 0.0
    %113 = vmatpush1.msra.mxu0 %v85
    %114 = vmatprep.subr.mxu0 0.0
    %115 = vmatpush1.msra.mxu0 %v86
    %116 = vmatprep.subr.mxu0 0.0
    %117 = vmatpush1.msra.mxu0 %v87
    %118 = vmatprep.subr.mxu0 0.0
    %119 = vmatpush1.msra.mxu0 %v88
    %120 = vmatprep.subr.mxu0 0.0
    %121 = vmatpush1.msra.mxu0 %v89
    %122 = vmatprep.subr.mxu0 0.0
    %123 = vmatpush1.msra.mxu0 0.0
    %124 = vmatprep.subr.mxu0 0.0
    %125 = vmatpush1.msra.mxu0 0.0
    %126 = vmatprep.subr.mxu0 0.0
    %127 = vmatpush1.msra.mxu0 0.0
    %128 = vmatprep.subr.mxu0 0.0
    %129 = vmatpush1.msra.mxu0 0.0
    %130 = vmatprep.subr.mxu0 0.0
    %131 = vmatpush1.msra.mxu0 0.0
    %132 = vmatprep.subr.mxu0 0.0
    %133 = vmatpush1.msra.mxu0 0.0
    %134 = vmatprep.subr.mxu0 0.0
    %135 = vmatpush1.msra.mxu0 0.0
    %136 = vmatprep.subr.mxu0 0.0
    %137 = vmatpush1.msra.mxu0 0.0
    %138 = vmatprep.subr.mxu0 0.0
    %139 = vmatpush1.msra.mxu0 0.0
    %140 = vmatprep.subr.mxu0 0.0
    %141 = vmatpush1.msra.mxu0 0.0
    %142 = vmatprep.subr.mxu0 0.0
    %143 = vmatpush1.msra.mxu0 0.0
    %144 = vmatprep.subr.mxu0 0.0
    %145 = vmatpush1.msra.mxu0 0.0
    %146 = vmatprep.subr.mxu0 0.0
    %147 = vmatpush1.msra.mxu0 0.0
    %148 = vmatprep.subr.mxu0 0.0
    %149 = vmatpush1.msra.mxu0 0.0
    %150 = vmatprep.subr.mxu0 0.0
    %151 = vmatpush1.msra.mxu0 0.0
    %152 = vmatprep.subr.mxu0 0.0
    %153 = vmatpush1.msra.mxu0 0.0
    %154 = vmatprep.mubr.f32.mxu0 0.0
    %155 = vmatmul.mubr.f32.gmra.mrb[0].mxu0 %v70
    %v156 = vpop.f32.mrb[0].mxu0
    %v157 = vadd.f32 0.0, %v156
    %v158 = vpop.f32.mrb[0].mxu0
    %159 = vmatprep.mubr.f32.mxu0 0.0
    %160 = vmatmul.mubr.f32.gmra.mrb[0].mxu0 %v71
    %v161 = vpop.f32.mrb[0].mxu0
    %v162 = vadd.f32 0.0, %v161
    %v163 = vpop.f32.mrb[0].mxu0
    %164 = vdwg.mxu0
    %v165 = vadd.f32 %v72, %v157
    %v166 = vadd.f32 %v73, %v162
    %167 = vst [vmem:[#allocation2] sm:$0xff] %v165
    %168 = vst [vmem:[#allocation2 + $0x8] sm:$0xff] %v166
    %v169 = vld [vmem:[#allocation3] sm:$0xff]
    %v170 = vld [vmem:[#allocation3 + $0x8] sm:$0xff]
    %v171 = vld [vmem:[#allocation9] sm:$0xff]
    %v172 = vld [vmem:[#allocation9 + $0x8] sm:$0xff]
    %v173 = vld [vmem:[#allocation9 + $0x10] sm:$0xff]
    %v174 = vld [vmem:[#allocation9 + $0x18] sm:$0xff]
    %v175 = vld [vmem:[#allocation9 + $0x20] sm:$0xff]
    %v176 = vld [vmem:[#allocation9 + $0x28] sm:$0xff]
    %v177 = vld [vmem:[#allocation9 + $0x30] sm:$0xff]
    %v178 = vld [vmem:[#allocation9 + $0x38] sm:$0xff]
    %v179 = vld [vmem:[#allocation9 + $0x40] sm:$0xff]
    %v180 = vld [vmem:[#allocation9 + $0x48] sm:$0xff]
    %v181 = vld [vmem:[#allocation9 + $0x50] sm:$0xff]
    %v182 = vld [vmem:[#allocation9 + $0x58] sm:$0xff]
    %v183 = vld [vmem:[#allocation9 + $0x60] sm:$0xff]
    %v184 = vld [vmem:[#allocation9 + $0x68] sm:$0xff]
    %v185 = vld [vmem:[#allocation9 + $0x70] sm:$0xff]
    %v186 = vld [vmem:[#allocation9 + $0x78] sm:$0xff]
    %187 = vmatprep.subr.mxu0 0.0
    %188 = vmatpush1.msra.mxu0 %v171
    %189 = vmatprep.subr.mxu0 0.0
    %190 = vmatpush1.msra.mxu0 %v172
    %191 = vmatprep.subr.mxu0 0.0
    %192 = vmatpush1.msra.mxu0 %v173
    %193 = vmatprep.subr.mxu0 0.0
    %194 = vmatpush1.msra.mxu0 %v174
    %195 = vmatprep.subr.mxu0 0.0
    %196 = vmatpush1.msra.mxu0 %v175
    %197 = vmatprep.subr.mxu0 0.0
    %198 = vmatpush1.msra.mxu0 %v176
    %199 = vmatprep.subr.mxu0 0.0
    %200 = vmatpush1.msra.mxu0 %v177
    %201 = vmatprep.subr.mxu0 0.0
    %202 = vmatpush1.msra.mxu0 %v178
    %203 = vmatprep.subr.mxu0 0.0
    %204 = vmatpush1.msra.mxu0 %v179
    %205 = vmatprep.subr.mxu0 0.0
    %206 = vmatpush1.msra.mxu0 %v180
    %207 = vmatprep.subr.mxu0 0.0
    %208 = vmatpush1.msra.mxu0 %v181
    %209 = vmatprep.subr.mxu0 0.0
    %210 = vmatpush1.msra.mxu0 %v182
    %211 = vmatprep.subr.mxu0 0.0
    %212 = vmatpush1.msra.mxu0 %v183
    %213 = vmatprep.subr.mxu0 0.0
    %214 = vmatpush1.msra.mxu0 %v184
    %215 = vmatprep.subr.mxu0 0.0
    %216 = vmatpush1.msra.mxu0 %v185
    %217 = vmatprep.subr.mxu0 0.0
    %218 = vmatpush1.msra.mxu0 %v186
    %219 = vmatprep.subr.mxu0 0.0
    %220 = vmatpush1.msra.mxu0 0.0
    %221 = vmatprep.subr.mxu0 0.0
    %222 = vmatpush1.msra.mxu0 0.0
    %223 = vmatprep.subr.mxu0 0.0
    %224 = vmatpush1.msra.mxu0 0.0
    %225 = vmatprep.subr.mxu0 0.0
    %226 = vmatpush1.msra.mxu0 0.0
    %227 = vmatprep.subr.mxu0 0.0
    %228 = vmatpush1.msra.mxu0 0.0
    %229 = vmatprep.subr.mxu0 0.0
    %230 = vmatpush1.msra.mxu0 0.0
    %231 = vmatprep.subr.mxu0 0.0
    %232 = vmatpush1.msra.mxu0 0.0
    %233 = vmatprep.subr.mxu0 0.0
    %234 = vmatpush1.msra.mxu0 0.0
    %235 = vmatprep.subr.mxu0 0.0
    %236 = vmatpush1.msra.mxu0 0.0
    %237 = vmatprep.subr.mxu0 0.0
    %238 = vmatpush1.msra.mxu0 0.0
    %239 = vmatprep.subr.mxu0 0.0
    %240 = vmatpush1.msra.mxu0 0.0
    %241 = vmatprep.subr.mxu0 0.0
    %242 = vmatpush1.msra.mxu0 0.0
    %243 = vmatprep.subr.mxu0 0.0
    %244 = vmatpush1.msra.mxu0 0.0
    %245 = vmatprep.subr.mxu0 0.0
    %246 = vmatpush1.msra.mxu0 0.0
    %247 = vmatprep.subr.mxu0 0.0
    %248 = vmatpush1.msra.mxu0 0.0
    %249 = vmatprep.subr.mxu0 0.0
    %250 = vmatpush1.msra.mxu0 0.0
    %251 = vmatprep.mubr.f32.mxu0 0.0
    %252 = vmatmul.mubr.f32.gmra.mrb[0].mxu0 %v70
    %v253 = vpop.f32.mrb[0].mxu0
    %v254 = vadd.f32 0.0, %v253
    %v255 = vpop.f32.mrb[0].mxu0
    %256 = vmatprep.mubr.f32.mxu0 0.0
    %257 = vmatmul.mubr.f32.gmra.mrb[0].mxu0 %v71
    %v258 = vpop.f32.mrb[0].mxu0
    %v259 = vadd.f32 0.0, %v258
    %v260 = vpop.f32.mrb[0].mxu0
    %261 = vdwg.mxu0
    %v262 = vadd.f32 %v169, %v254
    %v263 = vadd.f32 %v170, %v259
    %264 = vst [vmem:[#allocation3] sm:$0xff] %v262
    %265 = vst [vmem:[#allocation3 + $0x8] sm:$0xff] %v263
    // Predicated region
    $region38: #{tpu_custom_call.1} parent=1 // pred_check
      %p266 = pneg %p62
    $region39: #{tpu_custom_call.1} parent=1 // pred_check_branch
      %268 = sbr.rel (%p266) target = $region41
    $region40: #{tpu_custom_call.1} parent=1 // pred_region
      %v269 = vld [vmem:[#allocation2] sm:$0xff]
      %v270 = vld [vmem:[#allocation2 + $0x8] sm:$0xff]
      %v271 = vld [vmem:[%s3] sm:$0x1]
      %v273 = vlaneseq
      %v274 = vshrl.u32 %v273, 7
      %v275 = vsub.s32 0, %v274
      %v276 = vrot.slane %v271, %v275
      %v278 = vadd.f32 %v269, %v276
      %v279 = vadd.f32 %v270, %v276
      %v280 = vld [vmem:[#allocation3] sm:$0xff]
      %v281 = vld [vmem:[#allocation3 + $0x8] sm:$0xff]
      %v282 = vld [vmem:[%s4] sm:$0x1]
      %v284 = vlaneseq
      %v285 = vshrl.u32 %v284, 7
      %v286 = vsub.s32 0, %v285
      %v287 = vrot.slane %v282, %v286
      %v289 = vadd.f32 %v280, %v287
      %v290 = vadd.f32 %v281, %v287
      %v291 = vmul.f32 %v289, 0.5
      %v292 = vmul.f32 %v290, 0.5
      %v293 = vmul.f32 %v289, 0.70710677
      %v294 = vmul.f32 %v290, 0.70710677
      %v295 = verf.f32.pop %v293
      %v296 = verf.f32.pop %v294
      %v297 = vadd.f32 %v295, 1.0
      %v298 = vadd.f32 %v296, 1.0
      %v299 = vmul.f32 %v291, %v297
      %v300 = vmul.f32 %v292, %v298
      %v301 = vmul.f32 %v278, %v299
      %v302 = vmul.f32 %v279, %v300
      %303 = vst [vmem:[#allocation10] sm:$0xff] %v301
      %304 = vst [vmem:[#allocation10 + $0x8] sm:$0xff] %v302
    $region41: #{tpu_custom_call.1} parent=1 // pred_fallthru
      _
    // Predicated region
    $region42: #{tpu_custom_call.1} parent=1 // pred_check
      _
    $region43: #{tpu_custom_call.1} parent=1 // pred_check_branch
      %306 = sbr.rel (0) target = $region45
    $region44: #{tpu_custom_call.1} parent=1 // pred_region
      %s308 = ssub.s32 256, 256
      %309 = vsyncadd [#allocation6], %s308
      %s310 = sshll.u32 [#allocation10], 4
      %s311 = int_to_ptr.vmem [resolvable:$true] %s310
      %316 = dma.vmem_to_hbm [thread:$0]  %s311, 256, %s5, [#allocation6], 128, 128, 8
    $region45: #{tpu_custom_call.1} parent=1 // pred_fallthru
      _
    // Predicated region
    $region46: #{tpu_custom_call.1} parent=1 // pred_check
      _
    $region47: #{tpu_custom_call.1} parent=1 // pred_check_branch
      %318 = sbr.rel (0) target = $region49
    $region48: #{tpu_custom_call.1} parent=1 // pred_region
      %319 = dma.done [#allocation6], 256
    $region49: #{tpu_custom_call.1} parent=1 // pred_fallthru
      _
    %320 = vsyncpa [#allocation5], 1
    %321 = vsyncpa [#allocation8], 1
    %322 = vsyncpa [#allocation6], 1

</llo_original>
